<compile_context>
chip_gen: v5e
topology: v5e:2x2
jax: 0.10.0
libtpu: 0.0.40
codegen_flags: <defaults>
</compile_context>

<pallas_src>
import functools
import math

import jax
import jax.numpy as jnp
from jax.experimental import pallas as pl
from jax.experimental.pallas import tpu as pltpu

LANE = 128  # TPU vreg lane width


def _round_up(n, m):
    return ((n + m - 1) // m) * m


def mlp_kernel(x_ref, w1_ref, b1_ref, w2_ref, b2_ref, o_ref, *, precision):
    # fc1 + ReLU: bf16 (or f32-HIGHEST) MXU matmul, f32 accumulate, f32 epilogue.
    h = jnp.dot(x_ref[...].astype(w1_ref.dtype), w1_ref[...],
                preferred_element_type=jnp.float32, precision=precision)
    h = jnp.maximum(h + b1_ref[...].astype(jnp.float32), 0.0)
    # fc2 + ReLU
    y = jnp.dot(h.astype(w2_ref.dtype), w2_ref[...],
                preferred_element_type=jnp.float32, precision=precision)
    y = jnp.maximum(y + b2_ref[...].astype(jnp.float32), 0.0)
    o_ref[...] = y.astype(o_ref.dtype)


def _cost_estimate(B, in_p, hid_p, out_p, x_dtype, params):
    flops = 2 * B * (in_p * hid_p + hid_p * out_p)
    itm = jnp.dtype(x_dtype).itemsize
    bytes_accessed = (B * in_p * itm + B * out_p * itm
                      + sum(int(p.size) * jnp.dtype(p.dtype).itemsize
                            for p in params))
    return pl.CostEstimate(flops=flops, transcendentals=0,
                           bytes_accessed=bytes_accessed)


def network_forward(x, padded_params, *, batch_block=None):
    """Forward pass.

    x: (B, nb_in) f32. padded_params: lane-padded (W1, b1, W2, b2) from
    init_network_params. Returns the lane-dense padded output (B, out_p);
    the valid result is out[:, :nb_out] (padded columns are exactly zero).
    batch_block=None -> gridless, fully VMEM-resident (small B).
    batch_block=TB   -> 1-D grid over B, weights resident, "parallel" axis.
    """
    w1, b1, w2, b2 = padded_params
    in_p, hid_p = w1.shape
    out_p = w2.shape[1]
    B = x.shape[0]

    # Lane-align the contraction dim of x (ideally the producer already emits
    # a padded x so this is a no-op under jit).
    if x.shape[1] != in_p:
        x = jnp.pad(x, ((0, 0), (0, in_p - x.shape[1])))

    # Strict f32 path (weight_dtype=f32) needs HIGHEST to avoid silent bf16
    # decomposition; bf16 path uses the default single-pass MXU matmul.
    precision = (jax.lax.Precision.HIGHEST if w1.dtype == jnp.float32
                 else jax.lax.Precision.DEFAULT)
    kernel = functools.partial(mlp_kernel, precision=precision)
    cost = _cost_estimate(B, in_p, hid_p, out_p, x.dtype, padded_params)

    if batch_block is None:
        # Gridless: single invocation, every operand a whole-array VMEM block.
        return pl.pallas_call(
            kernel,
            out_shape=jax.ShapeDtypeStruct((B, out_p), x.dtype),
            in_specs=[pl.BlockSpec(memory_space=pltpu.MemorySpace.VMEM)] * 5,
            out_specs=pl.BlockSpec(memory_space=pltpu.MemorySpace.VMEM),
            cost_estimate=cost,
        )(x, w1, b1, w2, b2)

    # Batched path: grid over B, weights/biases use constant index_maps so they
    # are DMA'd once and stay VMEM-resident across all grid steps.
    tb = batch_block
    Bp = _round_up(B, tb)
    if Bp != B:
        x = jnp.pad(x, ((0, Bp - B), (0, 0)))

    # VMEM budget: double-buffered x/out tiles + resident weights/biases +
    # f32 intermediates, with 2x headroom; capped below v7x's 64 MiB physical.
    itm = jnp.dtype(x.dtype).itemsize
    wit = jnp.dtype(w1.dtype).itemsize
    need = (2 * tb * in_p * itm + 2 * tb * out_p * itm
            + in_p * hid_p * wit + hid_p * out_p * wit
            + (hid_p + out_p) * 4
            + tb * hid_p * 4 + tb * out_p * 4)
    vmem_limit = int(min(max(2 * need + (4 << 20), 16 << 20), 48 << 20))

    out = pl.pallas_call(
        kernel,
        out_shape=jax.ShapeDtypeStruct((Bp, out_p), x.dtype),
        grid=(Bp // tb,),
        in_specs=[
            pl.BlockSpec((tb, in_p), lambda i: (i, 0)),
            pl.BlockSpec((in_p, hid_p), lambda i: (0, 0)),
            pl.BlockSpec((1, hid_p), lambda i: (0, 0)),
            pl.BlockSpec((hid_p, out_p), lambda i: (0, 0)),
            pl.BlockSpec((1, out_p), lambda i: (0, 0)),
        ],
        out_specs=pl.BlockSpec((tb, out_p), lambda i: (i, 0)),
        compiler_params=pltpu.CompilerParams(
            dimension_semantics=("parallel",),   # split B tiles across v7x TCs
            vmem_limit_bytes=vmem_limit),
        cost_estimate=cost,
    )(x, w1, b1, w2, b2)
    return out if Bp == B else out[:B]  # row slice only if B wasn't tile-aligned


def init_network_params(key, nb_in, nb_hidden, nb_out, dtype=jnp.float32,
                        weight_dtype=jnp.bfloat16, n_multiple=LANE):
    """PyTorch nn.Linear default init: U(-1/sqrt(fan_in), 1/sqrt(fan_in)).

    Returns (padded_params, raw_params). Padded params have nb_in / nb_hidden /
    nb_out zero-padded to multiples of n_multiple (128; use 256 on v6e/v7x when
    those dims exceed 128). Weights stored in `weight_dtype` (bf16 default —
    MXU-native on all generations); biases stay in `dtype` for the f32 epilogue.
    Weights are stored transposed vs PyTorch, i.e. W1:(nb_in,H), W2:(H,O).
    """
    in_p = _round_up(nb_in, n_multiple)
    hid_p = _round_up(nb_hidden, n_multiple)
    out_p = _round_up(nb_out, n_multiple)
    k1w, k1b, k2w, k2b = jax.random.split(key, 4)

    bound1 = 1.0 / math.sqrt(nb_in)
    w1 = jax.random.uniform(k1w, (nb_in, nb_hidden), dtype, -bound1, bound1)
    b1 = jax.random.uniform(k1b, (1, nb_hidden), dtype, -bound1, bound1)
    bound2 = 1.0 / math.sqrt(nb_hidden)
    w2 = jax.random.uniform(k2w, (nb_hidden, nb_out), dtype, -bound2, bound2)
    b2 = jax.random.uniform(k2b, (1, nb_out), dtype, -bound2, bound2)

    # One-time lane-dense zero padding at parameter-build time.
    w1p = jnp.pad(w1, ((0, in_p - nb_in),
                       (0, hid_p - nb_hidden))).astype(weight_dtype)
    b1p = jnp.pad(b1, ((0, 0), (0, hid_p - nb_hidden))).astype(dtype)
    w2p = jnp.pad(w2, ((0, hid_p - nb_hidden),
                       (0, out_p - nb_out))).astype(weight_dtype)
    b2p = jnp.pad(b2, ((0, 0), (0, out_p - nb_out))).astype(dtype)
    return (w1p, b1p, w2p, b2p), (w1, b1, w2, b2)


if __name__ == "__main__":
    # Small shapes consistent with Network(nb_in, nb_out, nb_hidden).
    B, nb_in, nb_hidden, nb_out = 8, 32, 64, 16

    key = jax.random.PRNGKey(0)
    kx, kp, kb = jax.random.split(key, 3)
    x = jax.random.normal(kx, (B, nb_in), jnp.float32)

    padded_params, raw_params = init_network_params(kp, nb_in, nb_hidden, nb_out)
    w1, b1, w2, b2 = raw_params

    # --- gridless path (small batch) ---
    out = jax.block_until_ready(network_forward(x, padded_params))
    ref = jnp.maximum(jnp.maximum(x @ w1 + b1, 0.0) @ w2 + b2, 0.0)
    assert out.shape[0] == B and out.shape[1] % LANE == 0
    # bf16 weight/activation rounding through two layers -> loose tolerance.
    assert jnp.allclose(out[:, :nb_out], ref, atol=5e-2, rtol=5e-2)
    # Padded output lanes are exactly zero (inert zero padding).
    assert bool(jnp.all(out[:, nb_out:] == 0))

    # --- batched grid path (weights VMEM-resident, parallel over B tiles) ---
    Bb = 256
    xb = jax.random.normal(kb, (Bb, nb_in), jnp.float32)
    outb = jax.block_until_ready(
        network_forward(xb, padded_params, batch_block=128))
    refb = jnp.maximum(jnp.maximum(xb @ w1 + b1, 0.0) @ w2 + b2, 0.0)
    assert outb.shape[0] == Bb
    assert jnp.allclose(outb[:, :nb_out], refb, atol=5e-2, rtol=5e-2)
    assert bool(jnp.all(outb[:, nb_out:] == 0))

    print("KERNEL_OK")
</pallas_src>

<mosaic_0001>
module attributes {stable_mosaic.version = 11 : i64} {
  func.func @mlp_kernel(%arg0: memref<8x128xf32, #tpu.memory_space<vmem>>, %arg1: memref<128x128xbf16, #tpu.memory_space<vmem>>, %arg2: memref<1x128xf32, #tpu.memory_space<vmem>>, %arg3: memref<128x128xbf16, #tpu.memory_space<vmem>>, %arg4: memref<1x128xf32, #tpu.memory_space<vmem>>, %arg5: memref<8x128xf32, #tpu.memory_space<vmem>>) attributes {dimension_semantics = [], scalar_prefetch = 0 : i64, scratch_operands = 0 : i64, tpu.core_type = #tpu.core_type<tc>} {
    %c0 = arith.constant 0 : index
    %c0_0 = arith.constant 0 : index
    %0 = vector.load %arg0[%c0, %c0_0] : memref<8x128xf32, #tpu.memory_space<vmem>>, vector<8x128xf32>
    %1 = arith.truncf %0 : vector<8x128xf32> to vector<8x128xbf16>
    %c0_1 = arith.constant 0 : index
    %c0_2 = arith.constant 0 : index
    %2 = vector.load %arg1[%c0_1, %c0_2] : memref<128x128xbf16, #tpu.memory_space<vmem>>, vector<128x128xbf16>
    %cst = arith.constant dense<0.000000e+00> : vector<8x128xf32>
    %3 = tpu.matmul %1, %2, %cst {dimension_numbers = #tpu.dot_dimension_numbers<[1], [0], [0], [1], [0, 0, 1, 1], [], []>} : vector<8x128xbf16>, vector<128x128xbf16>, vector<8x128xf32> -> vector<8x128xf32>
    %c0_3 = arith.constant 0 : index
    %c0_4 = arith.constant 0 : index
    %4 = vector.load %arg2[%c0_3, %c0_4] : memref<1x128xf32, #tpu.memory_space<vmem>>, vector<1x128xf32>
    %5 = vector.broadcast %4 : vector<1x128xf32> to vector<8x128xf32>
    %6 = arith.addf %3, %5 : vector<8x128xf32>
    %cst_5 = arith.constant 0.000000e+00 : f32
    %7 = vector.broadcast %cst_5 : f32 to vector<8x128xf32>
    %8 = arith.maximumf %6, %7 : vector<8x128xf32>
    %9 = arith.truncf %8 : vector<8x128xf32> to vector<8x128xbf16>
    %c0_6 = arith.constant 0 : index
    %c0_7 = arith.constant 0 : index
    %10 = vector.load %arg3[%c0_6, %c0_7] : memref<128x128xbf16, #tpu.memory_space<vmem>>, vector<128x128xbf16>
    %cst_8 = arith.constant dense<0.000000e+00> : vector<8x128xf32>
    %11 = tpu.matmul %9, %10, %cst_8 {dimension_numbers = #tpu.dot_dimension_numbers<[1], [0], [0], [1], [0, 0, 1, 1], [], []>} : vector<8x128xbf16>, vector<128x128xbf16>, vector<8x128xf32> -> vector<8x128xf32>
    %c0_9 = arith.constant 0 : index
    %c0_10 = arith.constant 0 : index
    %12 = vector.load %arg4[%c0_9, %c0_10] : memref<1x128xf32, #tpu.memory_space<vmem>>, vector<1x128xf32>
    %13 = vector.broadcast %12 : vector<1x128xf32> to vector<8x128xf32>
    %14 = arith.addf %11, %13 : vector<8x128xf32>
    %cst_11 = arith.constant 0.000000e+00 : f32
    %15 = vector.broadcast %cst_11 : f32 to vector<8x128xf32>
    %16 = arith.maximumf %14, %15 : vector<8x128xf32>
    %c0_12 = arith.constant 0 : index
    %c0_13 = arith.constant 0 : index
    %17 = vector.load %arg5[%c0_12, %c0_13] : memref<8x128xf32, #tpu.memory_space<vmem>>, vector<8x128xf32>
    tpu.vector_store %arg5[%c0_12, %c0_13], %16 {strides = array<i32>} : memref<8x128xf32, #tpu.memory_space<vmem>>, vector<8x128xf32>,
    return
  }
}

</mosaic_0001>

<llo_original>
// kernel: tpu_custom_call.1
$region0: #{tpu_custom_call.1}
  #allocation0 [shape = 'u32[]', space=smem, size = 0x4, offset = 0x4, fixed_abs, tag = 'smem constant byte address 0x4 - core index']
  #allocation1 [shape = 'u32[72,128]{1,0:T(1,128)}', space=vmem, size = 0x9000, scoped, tag = 'internal scratch']
  %s0 = inlined_call_operand.hbm [shape: f32[8,128], index: 0, kind: input, shape index: {}]
  %s1 = inlined_call_operand.hbm [shape: bf16[128,128], index: 1, kind: input, shape index: {}]
  %s2 = inlined_call_operand.vmem [shape: f32[1,128], index: 2, kind: input, shape index: {}]
  %s3 = inlined_call_operand.hbm [shape: bf16[128,128], index: 3, kind: input, shape index: {}]
  %s4 = inlined_call_operand.vmem [shape: f32[1,128], index: 4, kind: input, shape index: {}]
  %s5 = inlined_call_operand.hbm [shape: f32[8,128], index: 5, kind: output, shape index: {}]
  %s6 = sld [smem:[#allocation0]]
  $region42: #{tpu_custom_call.1} parent=0
    _
  %s8 = ssub.s32 1, %s6
  %s9 = scalar_select 0, %s8, %s6
  $region1: #{tpu_custom_call.1} parent=0
    #allocation2 [shape = 'u8[4096]{0}', space=vmem, size = 0x1000, scoped, tag = 'input window, operand 0, single buffered']
    #allocation3 [shape = 's32[1]{0}', space=sflag, size = 0x4, scoped, tag = 'scoped memory for tpu_custom_call.1']
    #allocation4 [shape = 's32[1]{0}', space=sflag, size = 0x4, scoped, tag = 'scoped memory for tpu_custom_call.1']
    #allocation5 [shape = 'u8[32768]{0}', space=vmem, size = 0x8000, scoped, tag = 'input window, operand 1, single buffered']
    #allocation6 [shape = 's32[1]{0}', space=sflag, size = 0x4, scoped, tag = 'scoped memory for tpu_custom_call.1']
    #allocation7 [shape = 'u8[32768]{0}', space=vmem, size = 0x8000, scoped, tag = 'input window, operand 3, single buffered']
    #allocation8 [shape = 'u8[4096]{0}', space=vmem, size = 0x1000, scoped, tag = 'output window, operand 0, single buffered']
    %10 = vsyncpa [#allocation3], 0
    %11 = vsyncpa [#allocation6], 0
    %12 = vsyncpa [#allocation4], 0
    // Predicated region
    $region2: #{tpu_custom_call.1} parent=1 // pred_check
      _
    $region3: #{tpu_custom_call.1} parent=1 // pred_check_branch
      %14 = sbr.rel (0) target = $region5
    $region4: #{tpu_custom_call.1} parent=1 // pred_region
      %16 = vsyncadd [#allocation3], 0
      %s18 = sshll.u32 %s0, 4
      %s19 = int_to_ptr.hbm [resolvable:$true] %s18
      %s20 = sshll.u32 [#allocation2], 4
      %s21 = int_to_ptr.vmem [resolvable:$true] %s20
      %23 = dma.hbm_to_vmem [thread:$0]  %s19, 128, %s21, [#allocation3]
    $region5: #{tpu_custom_call.1} parent=1 // pred_fallthru
      _
    // Predicated region
    $region6: #{tpu_custom_call.1} parent=1 // pred_check
      _
    $region7: #{tpu_custom_call.1} parent=1 // pred_check_branch
      %25 = sbr.rel (0) target = $region9
    $region8: #{tpu_custom_call.1} parent=1 // pred_region
      %27 = vsyncadd [#allocation6], 0
      %s28 = sshll.u32 %s1, 4
      %s29 = int_to_ptr.hbm [resolvable:$true] %s28
      %s30 = sshll.u32 [#allocation5], 4
      %s31 = int_to_ptr.vmem [resolvable:$true] %s30
      %36 = dma.hbm_to_vmem [thread:$0]  %s29, 1024, %s31, [#allocation6], 64, 64, 4
    $region9: #{tpu_custom_call.1} parent=1 // pred_fallthru
      _
    // Predicated region
    $region10: #{tpu_custom_call.1} parent=1 // pred_check
      _
    $region11: #{tpu_custom_call.1} parent=1 // pred_check_branch
      %38 = sbr.rel (0) target = $region13
    $region12: #{tpu_custom_call.1} parent=1 // pred_region
      _
    $region13: #{tpu_custom_call.1} parent=1 // pred_fallthru
      _
    // Predicated region
    $region14: #{tpu_custom_call.1} parent=1 // pred_check
      _
    $region15: #{tpu_custom_call.1} parent=1 // pred_check_branch
      %40 = sbr.rel (0) target = $region17
    $region16: #{tpu_custom_call.1} parent=1 // pred_region
      %42 = vsyncadd [#allocation6], 0
      %s43 = sshll.u32 %s3, 4
      %s44 = int_to_ptr.hbm [resolvable:$true] %s43
      %s45 = sshll.u32 [#allocation7], 4
      %s46 = int_to_ptr.vmem [resolvable:$true] %s45
      %51 = dma.hbm_to_vmem [thread:$0]  %s44, 1024, %s46, [#allocation6], 64, 64, 4
    $region17: #{tpu_custom_call.1} parent=1 // pred_fallthru
      _
    // Predicated region
    $region18: #{tpu_custom_call.1} parent=1 // pred_check
      _
    $region19: #{tpu_custom_call.1} parent=1 // pred_check_branch
      %53 = sbr.rel (0) target = $region21
    $region20: #{tpu_custom_call.1} parent=1 // pred_region
      _
    $region21: #{tpu_custom_call.1} parent=1 // pred_fallthru
      _
    // Predicated region
    $region22: #{tpu_custom_call.1} parent=1 // pred_check
      _
    $region23: #{tpu_custom_call.1} parent=1 // pred_check_branch
      %55 = sbr.rel (0) target = $region25
    $region24: #{tpu_custom_call.1} parent=1 // pred_region
      %57 = dma.done [#allocation3], 128
    $region25: #{tpu_custom_call.1} parent=1 // pred_fallthru
      _
    // Predicated region
    $region26: #{tpu_custom_call.1} parent=1 // pred_check
      _
    $region27: #{tpu_custom_call.1} parent=1 // pred_check_branch
      %59 = sbr.rel (0) target = $region29
    $region28: #{tpu_custom_call.1} parent=1 // pred_region
      %61 = dma.done [#allocation6], 1024
    $region29: #{tpu_custom_call.1} parent=1 // pred_fallthru
      _
    // Predicated region
    $region30: #{tpu_custom_call.1} parent=1 // pred_check
      _
    $region31: #{tpu_custom_call.1} parent=1 // pred_check_branch
      %63 = sbr.rel (0) target = $region33
    $region32: #{tpu_custom_call.1} parent=1 // pred_region
      %65 = dma.done [#allocation6], 1024
    $region33: #{tpu_custom_call.1} parent=1 // pred_fallthru
      _
    %v66 = vld [vmem:[#allocation2] sm:$0xff]
    %v67 = vpack.c.bf16 %v66, %v66
    %v68 = vld [vmem:[#allocation5] sm:$0xf]
    %v69 = vld [vmem:[#allocation5 + $0x4] sm:$0xf]
    %v70 = vld [vmem:[#allocation5 + $0x8] sm:$0xf]
    %v71 = vld [vmem:[#allocation5 + $0xc] sm:$0xf]
    %v72 = vld [vmem:[#allocation5 + $0x10] sm:$0xf]
    %v73 = vld [vmem:[#allocation5 + $0x14] sm:$0xf]
    %v74 = vld [vmem:[#allocation5 + $0x18] sm:$0xf]
    %v75 = vld [vmem:[#allocation5 + $0x1c] sm:$0xf]
    %v76 = vld [vmem:[#allocation5 + $0x20] sm:$0xf]
    %v77 = vld [vmem:[#allocation5 + $0x24] sm:$0xf]
    %v78 = vld [vmem:[#allocation5 + $0x28] sm:$0xf]
    %v79 = vld [vmem:[#allocation5 + $0x2c] sm:$0xf]
    %v80 = vld [vmem:[#allocation5 + $0x30] sm:$0xf]
    %v81 = vld [vmem:[#allocation5 + $0x34] sm:$0xf]
    %v82 = vld [vmem:[#allocation5 + $0x38] sm:$0xf]
    %v83 = vld [vmem:[#allocation5 + $0x3c] sm:$0xf]
    %v84 = vld [vmem:[%s2] sm:$0x1]
    %v86 = vperm.slane %v84, 0
    %v104 = vunpack.c.l.b16 %v68
    %v105 = vunpack.c.l.b16 %v69
    %v106 = vunpack.c.l.b16 %v70
    %v107 = vunpack.c.l.b16 %v71
    %v108 = vunpack.c.l.b16 %v72
    %v109 = vunpack.c.l.b16 %v73
    %v110 = vunpack.c.l.b16 %v74
    %v111 = vunpack.c.l.b16 %v75
    %v112 = vunpack.c.l.b16 %v76
    %v113 = vunpack.c.l.b16 %v77
    %v114 = vunpack.c.l.b16 %v78
    %v115 = vunpack.c.l.b16 %v79
    %v116 = vunpack.c.l.b16 %v80
    %v117 = vunpack.c.l.b16 %v81
    %v118 = vunpack.c.l.b16 %v82
    %v119 = vunpack.c.l.b16 %v83
    %v120 = vpack.c.b16 %v105, %v104
    %v121 = vpack.c.b16 %v107, %v106
    %v122 = vpack.c.b16 %v109, %v108
    %v123 = vpack.c.b16 %v111, %v110
    %v124 = vpack.c.b16 %v113, %v112
    %v125 = vpack.c.b16 %v115, %v114
    %v126 = vpack.c.b16 %v117, %v116
    %v127 = vpack.c.b16 %v119, %v118
    %136 = vmatpush.bf16.msra.mxu0 %v127
    %137 = vmatpush.bf16.msra.mxu0 %v126
    %138 = vmatpush.bf16.msra.mxu0 %v125
    %139 = vmatpush.bf16.msra.mxu0 %v124
    %140 = vmatpush.bf16.msra.mxu0 %v123
    %141 = vmatpush.bf16.msra.mxu0 %v122
    %142 = vmatpush.bf16.msra.mxu0 %v121
    %143 = vmatpush.bf16.msra.mxu0 %v120
    %144 = vmatmul.bf16.gmra.mxu0 %v67
    %v145 = vpop.f32.mrf.mxu0
    %v146 = vadd.f32 %v86, %v145
    %v147 = vpop.f32.mrf.mxu0
    %148 = vdwg.mxu0
    %v149 = vmax.f32 %v146, 0.0
    %v150 = vpack.c.bf16 %v149, %v149
    %v151 = vld [vmem:[#allocation7] sm:$0xf]
    %v152 = vld [vmem:[#allocation7 + $0x4] sm:$0xf]
    %v153 = vld [vmem:[#allocation7 + $0x8] sm:$0xf]
    %v154 = vld [vmem:[#allocation7 + $0xc] sm:$0xf]
    %v155 = vld [vmem:[#allocation7 + $0x10] sm:$0xf]
    %v156 = vld [vmem:[#allocation7 + $0x14] sm:$0xf]
    %v157 = vld [vmem:[#allocation7 + $0x18] sm:$0xf]
    %v158 = vld [vmem:[#allocation7 + $0x1c] sm:$0xf]
    %v159 = vld [vmem:[#allocation7 + $0x20] sm:$0xf]
    %v160 = vld [vmem:[#allocation7 + $0x24] sm:$0xf]
    %v161 = vld [vmem:[#allocation7 + $0x28] sm:$0xf]
    %v162 = vld [vmem:[#allocation7 + $0x2c] sm:$0xf]
    %v163 = vld [vmem:[#allocation7 + $0x30] sm:$0xf]
    %v164 = vld [vmem:[#allocation7 + $0x34] sm:$0xf]
    %v165 = vld [vmem:[#allocation7 + $0x38] sm:$0xf]
    %v166 = vld [vmem:[#allocation7 + $0x3c] sm:$0xf]
    %v167 = vld [vmem:[%s4] sm:$0x1]
    %v169 = vperm.slane %v167, 0
    %v187 = vunpack.c.l.b16 %v151
    %v188 = vunpack.c.l.b16 %v152
    %v189 = vunpack.c.l.b16 %v153
    %v190 = vunpack.c.l.b16 %v154
    %v191 = vunpack.c.l.b16 %v155
    %v192 = vunpack.c.l.b16 %v156
    %v193 = vunpack.c.l.b16 %v157
    %v194 = vunpack.c.l.b16 %v158
    %v195 = vunpack.c.l.b16 %v159
    %v196 = vunpack.c.l.b16 %v160
    %v197 = vunpack.c.l.b16 %v161
    %v198 = vunpack.c.l.b16 %v162
    %v199 = vunpack.c.l.b16 %v163
    %v200 = vunpack.c.l.b16 %v164
    %v201 = vunpack.c.l.b16 %v165
    %v202 = vunpack.c.l.b16 %v166
    %v203 = vpack.c.b16 %v188, %v187
    %v204 = vpack.c.b16 %v190, %v189
    %v205 = vpack.c.b16 %v192, %v191
    %v206 = vpack.c.b16 %v194, %v193
    %v207 = vpack.c.b16 %v196, %v195
    %v208 = vpack.c.b16 %v198, %v197
    %v209 = vpack.c.b16 %v200, %v199
    %v210 = vpack.c.b16 %v202, %v201
    %219 = vmatpush.bf16.msra.mxu0 %v210
    %220 = vmatpush.bf16.msra.mxu0 %v209
    %221 = vmatpush.bf16.msra.mxu0 %v208
    %222 = vmatpush.bf16.msra.mxu0 %v207
    %223 = vmatpush.bf16.msra.mxu0 %v206
    %224 = vmatpush.bf16.msra.mxu0 %v205
    %225 = vmatpush.bf16.msra.mxu0 %v204
    %226 = vmatpush.bf16.msra.mxu0 %v203
    %227 = vmatmul.bf16.gmra.mxu0 %v150
    %v228 = vpop.f32.mrf.mxu0
    %v229 = vadd.f32 %v169, %v228
    %v230 = vpop.f32.mrf.mxu0
    %231 = vdwg.mxu0
    %v232 = vmax.f32 %v229, 0.0
    %233 = vst [vmem:[#allocation8] sm:$0xff] %v232
    // Predicated region
    $region34: #{tpu_custom_call.1} parent=1 // pred_check
      _
    $region35: #{tpu_custom_call.1} parent=1 // pred_check_branch
      %235 = sbr.rel (0) target = $region37
    $region36: #{tpu_custom_call.1} parent=1 // pred_region
      %237 = vsyncadd [#allocation4], 0
      %s239 = sshll.u32 [#allocation8], 4
      %s240 = int_to_ptr.vmem [resolvable:$true] %s239
      %s241 = sshll.u32 %s5, 4
      %s242 = int_to_ptr.hbm [resolvable:$true] %s241
      %244 = dma.vmem_to_hbm [thread:$0]  %s240, 128, %s242, [#allocation4]
    $region37: #{tpu_custom_call.1} parent=1 // pred_fallthru
      _
    // Predicated region
    $region38: #{tpu_custom_call.1} parent=1 // pred_check
      _
    $region39: #{tpu_custom_call.1} parent=1 // pred_check_branch
      %246 = sbr.rel (0) target = $region41
    $region40: #{tpu_custom_call.1} parent=1 // pred_region
      %248 = dma.done [#allocation4], 128
    $region41: #{tpu_custom_call.1} parent=1 // pred_fallthru
      _
    %249 = vsyncpa [#allocation3], 1
    %250 = vsyncpa [#allocation6], 1
    %251 = vsyncpa [#allocation4], 1

</llo_original>
